<compile_context>
chip_gen: v5e
topology: v5e:2x2
jax: 0.10.0
libtpu: 0.0.40
codegen_flags: <defaults>
</compile_context>

<pallas_src>
import functools

import jax
import jax.numpy as jnp
import numpy as np
from jax import lax
from jax.experimental import pallas as pl
from jax.experimental.pallas import tpu as pltpu


def _vmem_capacity_bytes():
    """Per-core VMEM capacity; conservative (v7x) fallback if the query fails."""
    try:
        return int(pltpu.get_tpu_info().vmem_capacity_bytes)
    except Exception:
        return 64 << 20


def _round_up(x, m):
    return -(-x // m) * m


def _choose_tile(B, C, K, S, hw, vmem_budget):
    """Largest lane-dense tile (multiple of 128) that fits the VMEM budget."""
    cs = C * S
    hw128 = _round_up(hw, 128)
    candidates = [t for t in (2048, 1024, 512, 256, 128) if t <= hw128] or [128]
    tp = 128
    for t in candidates:
        img_b = 2 * cs * K * 4                      # double-buffered image block
        io_b = 2 * (2 * t) * 4 + 2 * (C * t) * 4    # grid + out double buffers
        tmp_b = (2 * cs + K + S + 2 * C) * t * 4    # f32 in-kernel temporaries
        if img_b + io_b + tmp_b <= vmem_budget:
            tp = t
            break
    # v7x megacore: keep at least 2 grid steps so both TensorCores get work.
    while B * (-(-hw // tp)) < 2 and tp > 128:
        tp //= 2
    return tp


def _deform_kernel(img_ref, grid_ref, out_ref, *, C, K, S, TP, k_row):
    """One (batch, output-pixel tile) per grid step.

    img_ref  : (1, C*S, K)  image, contracted spatial axis last
    grid_ref : (1, 2, TP)   sampling grid tile, row 0 = x, row 1 = y
    out_ref  : (1, C, TP)   resampled output tile (lane-dense)
    """
    s_row = 1 - k_row
    img = img_ref[0].astype(jnp.float32)             # (C*S, K)
    g = grid_ref[0].astype(jnp.float32)              # (2, TP)

    gk = g[k_row:k_row + 1, :]                       # (1, TP) contracted coord
    gs = g[s_row:s_row + 1, :]                       # (1, TP) broadcast coord

    # align_corners=False unnormalization; clamp so the int32 cast can never
    # overflow (clamped samples are fully out of range -> weight 0).
    fk = jnp.clip(((gk + 1.0) * K - 1.0) * 0.5, -2.0, float(K) + 1.0)
    fs = jnp.clip(((gs + 1.0) * S - 1.0) * 0.5, -2.0, float(S) + 1.0)

    k0f = jnp.floor(fk)
    s0f = jnp.floor(fs)
    k0 = k0f.astype(jnp.int32)
    s0 = s0f.astype(jnp.int32)
    k1 = k0 + 1
    s1 = s0 + 1

    wk1 = fk - k0f
    wk0 = 1.0 - wk1
    ws1 = fs - s0f
    ws0 = 1.0 - ws1

    def inb(v, n):
        # zeros padding: out-of-bounds corners contribute nothing.
        return ((v >= 0) & (v <= n - 1)).astype(jnp.float32)

    ak0 = wk0 * inb(k0, K)                           # (1, TP)
    ak1 = wk1 * inb(k1, K)
    as0 = ws0 * inb(s0, S)
    as1 = ws1 * inb(s1, S)

    # One-hot interpolation weights via jnp.where (no bool->f32 cast + mul).
    kin = lax.broadcasted_iota(jnp.int32, (K, TP), 0)
    wk = jnp.where(kin == k0, ak0, 0.0) + jnp.where(kin == k1, ak1, 0.0)  # (K, TP)

    sin = lax.broadcasted_iota(jnp.int32, (S, TP), 0)
    wsw = jnp.where(sin == s0, as0, 0.0) + jnp.where(sin == s1, as1, 0.0)  # (S, TP)

    # Stage 1: contract the (larger) K spatial axis on the MXU.
    t = lax.dot_general(img, wk, (((1,), (0,)), ((), ())),
                        preferred_element_type=jnp.float32)      # (C*S, TP)

    # Stage 2: apply the S weights by broadcast and reduce S on the XLU.
    t3 = t.reshape(C, S, TP)                                     # free when S%8==0
    out = jnp.sum(t3 * wsw[None, :, :], axis=1)                  # (C, TP)
    out_ref[0] = out.astype(out_ref.dtype)


def deformable_transform(img, grid):
    """Pallas equivalent of DeformableTransform.forward (bilinear / zeros).

    img  : (B, C, H, W)
    grid : (B, H, W, 2)   values in [-1, 1], last axis = (x, y)
    returns (B, C, H, W)
    """
    B, C, H, W = img.shape
    assert grid.shape == (B, H, W, 2)
    HW = H * W

    # Contract the larger spatial axis in stage 1 to fill more MXU depth.
    if W >= H:
        K, S, k_row = W, H, 0
        img2 = img.reshape(B, C * H, W)
    else:
        K, S, k_row = H, W, 1
        img2 = jnp.swapaxes(img, 2, 3).reshape(B, C * W, H)
    cs = C * S

    vmem_cap = _vmem_capacity_bytes()
    TP = _choose_tile(B, C, K, S, HW, vmem_budget=vmem_cap // 4)
    n_t = -(-HW // TP)
    HWp = n_t * TP

    # Lane-dense grid (B, 2, HW), padded so every tile is a full 128-lane
    # multiple; padded output columns are sliced away below.
    grid2 = grid.reshape(B, HW, 2).transpose(0, 2, 1)
    if HWp != HW:
        grid2 = jnp.pad(grid2, ((0, 0), (0, 0), (0, HWp - HW)))

    est = (2 * cs * K * img2.dtype.itemsize
           + 2 * 2 * TP * grid2.dtype.itemsize
           + 2 * C * TP * img.dtype.itemsize
           + (2 * cs + K + S + 2 * C) * TP * 4)
    vmem_limit = int(min(vmem_cap // 2, max(2 * est, 32 << 20)))

    # Image block index is t-invariant; drop its double buffer when it would
    # consume a large slice of the (v7x-sized) scoped budget.
    img_spec_kwargs = {}
    if 2 * cs * K * img2.dtype.itemsize > vmem_cap // 8:
        img_spec_kwargs["pipeline_mode"] = pl.Buffered(1)
    img_spec = pl.BlockSpec((1, cs, K), lambda b, t: (b, 0, 0), **img_spec_kwargs)

    cost = pl.CostEstimate(
        flops=int(B * (2 * cs * K * HWp + 2 * cs * HWp)),
        transcendentals=0,
        # img block index is t-invariant -> it is DMA'd once per batch.
        bytes_accessed=int(B * cs * K * img2.dtype.itemsize
                           + B * 2 * HWp * grid2.dtype.itemsize
                           + B * C * HWp * img.dtype.itemsize),
    )

    out_flat = pl.pallas_call(
        functools.partial(_deform_kernel, C=C, K=K, S=S, TP=TP, k_row=k_row),
        out_shape=jax.ShapeDtypeStruct((B, C, HWp), img.dtype),
        grid_spec=pltpu.PrefetchScalarGridSpec(
            num_scalar_prefetch=0,
            grid=(B, n_t),
            in_specs=[
                img_spec,
                pl.BlockSpec((1, 2, TP), lambda b, t: (b, 0, t)),
            ],
            out_specs=pl.BlockSpec((1, C, TP), lambda b, t: (b, 0, t)),
        ),
        compiler_params=pltpu.CompilerParams(
            dimension_semantics=("parallel", "parallel"),
            vmem_limit_bytes=vmem_limit),
        cost_estimate=cost,
    )(img2, grid2)

    if HWp != HW:
        out_flat = out_flat[:, :, :HW]
    return out_flat.reshape(B, C, H, W)


def _reference_grid_sample(img, grid):
    """Pure-JAX bilinear grid_sample (zeros padding, align_corners=False)."""
    B, C, H, W = img.shape
    x = grid[..., 0]
    y = grid[..., 1]
    ix = ((x + 1.0) * W - 1.0) * 0.5
    iy = ((y + 1.0) * H - 1.0) * 0.5
    x0f = jnp.floor(ix)
    y0f = jnp.floor(iy)
    x0 = x0f.astype(jnp.int32)
    y0 = y0f.astype(jnp.int32)
    x1 = x0 + 1
    y1 = y0 + 1
    wx1 = ix - x0f
    wx0 = 1.0 - wx1
    wy1 = iy - y0f
    wy0 = 1.0 - wy1

    b_idx = jnp.arange(B)[:, None, None, None]
    c_idx = jnp.arange(C)[None, :, None, None]

    def gather(yc, xc):
        valid = ((xc >= 0) & (xc <= W - 1) &
                 (yc >= 0) & (yc <= H - 1)).astype(img.dtype)     # (B,H,W)
        xi = jnp.clip(xc, 0, W - 1)
        yi = jnp.clip(yc, 0, H - 1)
        v = img[b_idx, c_idx, yi[:, None], xi[:, None]]           # (B,C,H,W)
        return v * valid[:, None]

    out = (gather(y0, x0) * (wy0 * wx0)[:, None] +
           gather(y0, x1) * (wy0 * wx1)[:, None] +
           gather(y1, x0) * (wy1 * wx0)[:, None] +
           gather(y1, x1) * (wy1 * wx1)[:, None])
    return out


if __name__ == "__main__":
    key = jax.random.PRNGKey(0)
    k_img, k_grid = jax.random.split(key)

    B, C, H, W = 2, 4, 16, 16
    img = jax.random.normal(k_img, (B, C, H, W), dtype=jnp.float32)

    # Identity sampling grid plus a small random deformation (some samples go
    # slightly out of bounds to exercise the zeros padding path).
    ys = (jnp.arange(H, dtype=jnp.float32) + 0.5) / H * 2.0 - 1.0
    xs = (jnp.arange(W, dtype=jnp.float32) + 0.5) / W * 2.0 - 1.0
    gy, gx = jnp.meshgrid(ys, xs, indexing="ij")
    base = jnp.stack([gx, gy], axis=-1)                     # (H, W, 2), (x, y)
    noise = 0.15 * jax.random.normal(k_grid, (B, H, W, 2), dtype=jnp.float32)
    grid = base[None] + noise                               # (B, H, W, 2)

    out = deformable_transform(img, grid)
    out = jax.block_until_ready(out)

    ref = _reference_grid_sample(img, grid)
    np.testing.assert_allclose(np.asarray(out), np.asarray(ref),
                               rtol=1e-5, atol=1e-5)

    print("KERNEL_OK")
</pallas_src>

<mosaic_0001>
module attributes {stable_mosaic.version = 11 : i64} {
  func.func @_deform_kernel(%arg0: i32, %arg1: i32, %arg2: memref<1x64x16xf32, #tpu.memory_space<vmem>>, %arg3: memref<1x2x256xf32, #tpu.memory_space<vmem>>, %arg4: memref<1x4x256xf32, #tpu.memory_space<vmem>>) attributes {dimension_semantics = [#tpu.dimension_semantics<parallel>, #tpu.dimension_semantics<parallel>], iteration_bounds = array<i64: 2, 1>, scalar_prefetch = 0 : i64, scratch_operands = 0 : i64, tpu.core_type = #tpu.core_type<tc>, window_params = [{transform_indices = @transform_0, window_bounds = array<i64: 1, 64, 16>}, {transform_indices = @transform_1, window_bounds = array<i64: 1, 2, 256>}, {transform_indices = @transform_2, window_bounds = array<i64: 1, 4, 256>}]} {
    %c0 = arith.constant 0 : index
    %c0_0 = arith.constant 0 : index
    %c0_1 = arith.constant 0 : index
    %0 = vector.load %arg2[%c0, %c0_0, %c0_1] : memref<1x64x16xf32, #tpu.memory_space<vmem>>, vector<1x64x16xf32>
    %1 = vector.shape_cast %0 : vector<1x64x16xf32> to vector<64x16xf32>
    %c0_2 = arith.constant 0 : index
    %c0_3 = arith.constant 0 : index
    %c0_4 = arith.constant 0 : index
    %2 = vector.load %arg3[%c0_2, %c0_3, %c0_4] : memref<1x2x256xf32, #tpu.memory_space<vmem>>, vector<1x2x256xf32>
    %3 = vector.shape_cast %2 : vector<1x2x256xf32> to vector<2x256xf32>
    %4 = vector.extract_strided_slice %3 {offsets = [0, 0], sizes = [1, 256], strides = [1, 1]} : vector<2x256xf32> to vector<1x256xf32>
    %5 = vector.extract_strided_slice %3 {offsets = [1, 0], sizes = [1, 256], strides = [1, 1]} : vector<2x256xf32> to vector<1x256xf32>
    %cst = arith.constant 1.000000e+00 : f32
    %6 = vector.broadcast %cst : f32 to vector<1x256xf32>
    %7 = arith.addf %4, %6 : vector<1x256xf32>
    %cst_5 = arith.constant 1.600000e+01 : f32
    %8 = vector.broadcast %cst_5 : f32 to vector<1x256xf32>
    %9 = arith.mulf %7, %8 : vector<1x256xf32>
    %cst_6 = arith.constant 1.000000e+00 : f32
    %10 = vector.broadcast %cst_6 : f32 to vector<1x256xf32>
    %11 = arith.subf %9, %10 : vector<1x256xf32>
    %cst_7 = arith.constant 5.000000e-01 : f32
    %12 = vector.broadcast %cst_7 : f32 to vector<1x256xf32>
    %13 = arith.mulf %11, %12 : vector<1x256xf32>
    %cst_8 = arith.constant -2.000000e+00 : f32
    %cst_9 = arith.constant 1.700000e+01 : f32
    %14 = vector.broadcast %cst_8 : f32 to vector<1x256xf32>
    %15 = arith.maximumf %14, %13 : vector<1x256xf32>
    %16 = vector.broadcast %cst_9 : f32 to vector<1x256xf32>
    %17 = arith.minimumf %16, %15 : vector<1x256xf32>
    %cst_10 = arith.constant 1.000000e+00 : f32
    %18 = vector.broadcast %cst_10 : f32 to vector<1x256xf32>
    %19 = arith.addf %5, %18 : vector<1x256xf32>
    %cst_11 = arith.constant 1.600000e+01 : f32
    %20 = vector.broadcast %cst_11 : f32 to vector<1x256xf32>
    %21 = arith.mulf %19, %20 : vector<1x256xf32>
    %cst_12 = arith.constant 1.000000e+00 : f32
    %22 = vector.broadcast %cst_12 : f32 to vector<1x256xf32>
    %23 = arith.subf %21, %22 : vector<1x256xf32>
    %cst_13 = arith.constant 5.000000e-01 : f32
    %24 = vector.broadcast %cst_13 : f32 to vector<1x256xf32>
    %25 = arith.mulf %23, %24 : vector<1x256xf32>
    %cst_14 = arith.constant -2.000000e+00 : f32
    %cst_15 = arith.constant 1.700000e+01 : f32
    %26 = vector.broadcast %cst_14 : f32 to vector<1x256xf32>
    %27 = arith.maximumf %26, %25 : vector<1x256xf32>
    %28 = vector.broadcast %cst_15 : f32 to vector<1x256xf32>
    %29 = arith.minimumf %28, %27 : vector<1x256xf32>
    %30 = math.floor %17 : vector<1x256xf32>
    %31 = math.floor %29 : vector<1x256xf32>
    %32 = arith.fptosi %30 : vector<1x256xf32> to vector<1x256xi32>
    %33 = arith.fptosi %31 : vector<1x256xf32> to vector<1x256xi32>
    %c1_i32 = arith.constant 1 : i32
    %34 = vector.broadcast %c1_i32 : i32 to vector<1x256xi32>
    %35 = arith.addi %32, %34 : vector<1x256xi32>
    %c1_i32_16 = arith.constant 1 : i32
    %36 = vector.broadcast %c1_i32_16 : i32 to vector<1x256xi32>
    %37 = arith.addi %33, %36 : vector<1x256xi32>
    %38 = arith.subf %17, %30 : vector<1x256xf32>
    %cst_17 = arith.constant 1.000000e+00 : f32
    %39 = vector.broadcast %cst_17 : f32 to vector<1x256xf32>
    %40 = arith.subf %39, %38 : vector<1x256xf32>
    %41 = arith.subf %29, %31 : vector<1x256xf32>
    %cst_18 = arith.constant 1.000000e+00 : f32
    %42 = vector.broadcast %cst_18 : f32 to vector<1x256xf32>
    %43 = arith.subf %42, %41 : vector<1x256xf32>
    %c0_i32 = arith.constant 0 : i32
    %44 = vector.broadcast %c0_i32 : i32 to vector<1x256xi32>
    %45 = arith.cmpi sge, %32, %44 : vector<1x256xi32>
    %c15_i32 = arith.constant 15 : i32
    %46 = vector.broadcast %c15_i32 : i32 to vector<1x256xi32>
    %47 = arith.cmpi sle, %32, %46 : vector<1x256xi32>
    %48 = arith.andi %45, %47 : vector<1x256xi1>
    %49 = arith.extui %48 : vector<1x256xi1> to vector<1x256xi32>
    %50 = arith.sitofp %49 : vector<1x256xi32> to vector<1x256xf32>
    %51 = arith.mulf %40, %50 : vector<1x256xf32>
    %c0_i32_19 = arith.constant 0 : i32
    %52 = vector.broadcast %c0_i32_19 : i32 to vector<1x256xi32>
    %53 = arith.cmpi sge, %35, %52 : vector<1x256xi32>
    %c15_i32_20 = arith.constant 15 : i32
    %54 = vector.broadcast %c15_i32_20 : i32 to vector<1x256xi32>
    %55 = arith.cmpi sle, %35, %54 : vector<1x256xi32>
    %56 = arith.andi %53, %55 : vector<1x256xi1>
    %57 = arith.extui %56 : vector<1x256xi1> to vector<1x256xi32>
    %58 = arith.sitofp %57 : vector<1x256xi32> to vector<1x256xf32>
    %59 = arith.mulf %38, %58 : vector<1x256xf32>
    %c0_i32_21 = arith.constant 0 : i32
    %60 = vector.broadcast %c0_i32_21 : i32 to vector<1x256xi32>
    %61 = arith.cmpi sge, %33, %60 : vector<1x256xi32>
    %c15_i32_22 = arith.constant 15 : i32
    %62 = vector.broadcast %c15_i32_22 : i32 to vector<1x256xi32>
    %63 = arith.cmpi sle, %33, %62 : vector<1x256xi32>
    %64 = arith.andi %61, %63 : vector<1x256xi1>
    %65 = arith.extui %64 : vector<1x256xi1> to vector<1x256xi32>
    %66 = arith.sitofp %65 : vector<1x256xi32> to vector<1x256xf32>
    %67 = arith.mulf %43, %66 : vector<1x256xf32>
    %c0_i32_23 = arith.constant 0 : i32
    %68 = vector.broadcast %c0_i32_23 : i32 to vector<1x256xi32>
    %69 = arith.cmpi sge, %37, %68 : vector<1x256xi32>
    %c15_i32_24 = arith.constant 15 : i32
    %70 = vector.broadcast %c15_i32_24 : i32 to vector<1x256xi32>
    %71 = arith.cmpi sle, %37, %70 : vector<1x256xi32>
    %72 = arith.andi %69, %71 : vector<1x256xi1>
    %73 = arith.extui %72 : vector<1x256xi1> to vector<1x256xi32>
    %74 = arith.sitofp %73 : vector<1x256xi32> to vector<1x256xf32>
    %75 = arith.mulf %41, %74 : vector<1x256xf32>
    %76 = tpu.iota {dimensions = array<i32: 0>} : vector<16x256xi32>
    %77 = vector.broadcast %32 : vector<1x256xi32> to vector<16x256xi32>
    %78 = arith.cmpi eq, %76, %77 : vector<16x256xi32>
    %cst_25 = arith.constant 0.000000e+00 : f32
    %79 = vector.shape_cast %51 : vector<1x256xf32> to vector<1x256xf32>
    %80 = vector.broadcast %79 : vector<1x256xf32> to vector<16x256xf32>
    %81 = vector.broadcast %cst_25 : f32 to vector<16x256xf32>
    %82 = arith.select %78, %80, %81 : vector<16x256xi1>, vector<16x256xf32>
    %83 = vector.broadcast %35 : vector<1x256xi32> to vector<16x256xi32>
    %84 = arith.cmpi eq, %76, %83 : vector<16x256xi32>
    %cst_26 = arith.constant 0.000000e+00 : f32
    %85 = vector.shape_cast %59 : vector<1x256xf32> to vector<1x256xf32>
    %86 = vector.broadcast %85 : vector<1x256xf32> to vector<16x256xf32>
    %87 = vector.broadcast %cst_26 : f32 to vector<16x256xf32>
    %88 = arith.select %84, %86, %87 : vector<16x256xi1>, vector<16x256xf32>
    %89 = arith.addf %82, %88 : vector<16x256xf32>
    %90 = tpu.iota {dimensions = array<i32: 0>} : vector<16x256xi32>
    %91 = vector.broadcast %33 : vector<1x256xi32> to vector<16x256xi32>
    %92 = arith.cmpi eq, %90, %91 : vector<16x256xi32>
    %cst_27 = arith.constant 0.000000e+00 : f32
    %93 = vector.shape_cast %67 : vector<1x256xf32> to vector<1x256xf32>
    %94 = vector.broadcast %93 : vector<1x256xf32> to vector<16x256xf32>
    %95 = vector.broadcast %cst_27 : f32 to vector<16x256xf32>
    %96 = arith.select %92, %94, %95 : vector<16x256xi1>, vector<16x256xf32>
    %97 = vector.broadcast %37 : vector<1x256xi32> to vector<16x256xi32>
    %98 = arith.cmpi eq, %90, %97 : vector<16x256xi32>
    %cst_28 = arith.constant 0.000000e+00 : f32
    %99 = vector.shape_cast %75 : vector<1x256xf32> to vector<1x256xf32>
    %100 = vector.broadcast %99 : vector<1x256xf32> to vector<16x256xf32>
    %101 = vector.broadcast %cst_28 : f32 to vector<16x256xf32>
    %102 = arith.select %98, %100, %101 : vector<16x256xi1>, vector<16x256xf32>
    %103 = arith.addf %96, %102 : vector<16x256xf32>
    %cst_29 = arith.constant dense<0.000000e+00> : vector<64x256xf32>
    %104 = tpu.matmul %1, %89, %cst_29 {dimension_numbers = #tpu.dot_dimension_numbers<[1], [0], [0], [1], [0, 0, 1, 1], [], []>} : vector<64x16xf32>, vector<16x256xf32>, vector<64x256xf32> -> vector<64x256xf32>
    %105 = vector.shape_cast %104 : vector<64x256xf32> to vector<4x16x256xf32>
    %106 = vector.shape_cast %103 : vector<16x256xf32> to vector<1x16x256xf32>
    %107 = vector.broadcast %106 : vector<1x16x256xf32> to vector<4x16x256xf32>
    %108 = arith.mulf %105, %107 : vector<4x16x256xf32>
    %cst_30 = arith.constant dense<0.000000e+00> : vector<4x256xf32>
    %109 = vector.multi_reduction <add>, %108, %cst_30 [1] : vector<4x16x256xf32> to vector<4x256xf32>
    %c0_31 = arith.constant 0 : index
    %c0_32 = arith.constant 0 : index
    %c0_33 = arith.constant 0 : index
    %110 = vector.load %arg4[%c0_31, %c0_32, %c0_33] : memref<1x4x256xf32, #tpu.memory_space<vmem>>, vector<1x4x256xf32>
    %111 = vector.shape_cast %110 : vector<1x4x256xf32> to vector<4x256xf32>
    %112 = vector.shape_cast %109 : vector<4x256xf32> to vector<1x4x256xf32>
    tpu.vector_store %arg4[%c0_31, %c0_32, %c0_33], %112 {strides = array<i32>} : memref<1x4x256xf32, #tpu.memory_space<vmem>>, vector<1x4x256xf32>,
    return
  }
  func.func @transform_0(%arg0: i32, %arg1: i32) -> (i32, i32, i32) {
    %c0_i32 = arith.constant 0 : i32
    %c0_i32_0 = arith.constant 0 : i32
    %c0_i32_1 = arith.constant 0 : i32
    return %arg0, %c0_i32, %c0_i32_0 : i32, i32, i32
  }
  func.func @transform_1(%arg0: i32, %arg1: i32) -> (i32, i32, i32) {
    %c0_i32 = arith.constant 0 : i32
    %c0_i32_0 = arith.constant 0 : i32
    return %arg0, %c0_i32, %arg1 : i32, i32, i32
  }
  func.func @transform_2(%arg0: i32, %arg1: i32) -> (i32, i32, i32) {
    %c0_i32 = arith.constant 0 : i32
    %c0_i32_0 = arith.constant 0 : i32
    return %arg0, %c0_i32, %arg1 : i32, i32, i32
  }
}

</mosaic_0001>

<llo_original>
// kernel: tpu_custom_call.1
$region0: #{tpu_custom_call.1}
  #allocation0 [shape = 'u32[]', space=smem, size = 0x4, offset = 0x4, fixed_abs, tag = 'smem constant byte address 0x4 - core index']
  #allocation1 [shape = 'u32[72,128]{1,0:T(1,128)}', space=vmem, size = 0x9000, scoped, tag = 'internal scratch']
  %s0 = inlined_call_operand.vmem [shape: f32[2,64,16], index: 0, kind: input, shape index: {}]
  %s1 = inlined_call_operand.vmem [shape: f32[2,2,256], index: 1, kind: input, shape index: {}]
  %s2 = inlined_call_operand.hbm [shape: f32[2,4,256], index: 2, kind: output, shape index: {}]
  %s3 = sld [smem:[#allocation0]]
  $region41: #{tpu_custom_call.1} parent=0
    _
  %s5 = ssub.s32 1, %s3
  %s6 = scalar_select 0, %s5, %s3
  $region1: #{tpu_custom_call.1} parent=0
    #allocation2 [shape = 'u8[8192]{0}', space=vmem, size = 0x2000, scoped, tag = 'output window, operand 0']
    #allocation3 [shape = 's32[2]{0}', space=sflag, size = 0x8, scoped, tag = 'scoped memory for tpu_custom_call.1']
    %7 = vsyncpa [#allocation3], 0
    %s8 = scalar_lea.sflag [#allocation3], 1
    %9 = vsyncpa %s8, 0
    loop: start=0, step=1, limit=4
    $region2: #{tpu_custom_call.1} parent=1 // loop_pre_header
      _
    $region3: #{tpu_custom_call.1} parent=1 // loop_header
      %s11 = sphi 0, %s15
      %p12 = scmp.ge.s32.totalorder %s11, 4
      %s18 = sphi 0, %s30
      %s19 = sphi 0, %s26
      %s20 = sphi 0, %s18
      %s21 = sphi 0, %s19
      %s22 = sphi 0, %s20
      %s23 = sphi 0, %s21
      %s33 = sphi 0, %s35
      %s36 = sphi 0, %s33
      %s37 = sphi 0, %s36
      %s53 = sphi 0, %s37
      %s61 = sphi 0, %s63
      %s64 = sphi 0, %s61
      %s65 = sphi 0, %s64
      %s81 = sphi 0, %s65
      %s89 = sphi 0, %s91
      %s92 = sphi 0, %s89
      %s93 = sphi 0, %s92
      %s109 = sphi 0, %s93
    $region4: #{tpu_custom_call.1} parent=1 // loop_header_branch
      %14 = sbr.rel (%p12) target = $region8
    $region5: #{tpu_custom_call.1} parent=1 // loop_body
      %s16 = ssub.s32 %s11, 1
      %s17 = ssub.s32 %s11, 2
      %s24 = sadd.s32 1, %s19
      %p25 = scmp.ge.s32.totalorder %s24, 1
      %s26 = scalar_select %p25, 0, %s24
      %s27 = sadd.s32 1, %s18
      %s28 = scalar_select %p25, %s27, %s18
      %p29 = scmp.ge.s32.totalorder %s28, 2
      %s30 = scalar_select %p29, 0, %s28
      %s31 = ssub.s32 %s18, %s30
      %p32 = scmp.eq.s32.totalorder %s31, 0
      %s34 = sadd.s32 %s33, 1
      %s35 = scalar_select %p32, %s33, %s34
      %p38 = pneg %p32
      %p39 = scmp.eq.s32.totalorder %s11, 1
      %p40 = por %p38, %p39
      %p41 = scmp.ne.s32.totalorder %s33, %s36
      %p42 = scmp.eq.s32.totalorder %s11, 0
      %p43 = por %p41, %p42
      %p44 = scmp.ne.s32.totalorder %s33, %s36
      %p45 = scmp.eq.s32.totalorder %s16, 1
      %p46 = por %p44, %p45
      %p47 = scmp.ne.s32.totalorder %s36, %s37
      %p48 = scmp.eq.s32.totalorder %s16, 0
      %p49 = por %p47, %p48
      %p50 = scmp.ne.s32.totalorder %s36, %s37
      %p51 = scmp.eq.s32.totalorder %s17, 1
      %p52 = por %p50, %p51
      %p54 = scmp.ne.s32.totalorder %s37, %s53
      %p55 = scmp.eq.s32.totalorder %s17, 0
      %p56 = por %p54, %p55
      %s57 = ssub.s32 %s18, %s30
      %s58 = ssub.s32 %s19, %s26
      %s59 = sor.u32 %s57, %s58
      %p60 = scmp.eq.s32.totalorder %s59, 0
      %s62 = sadd.s32 %s61, 1
      %s63 = scalar_select %p60, %s61, %s62
      %p66 = pneg %p60
      %p67 = scmp.eq.s32.totalorder %s11, 1
      %p68 = por %p66, %p67
      %p69 = scmp.ne.s32.totalorder %s61, %s64
      %p70 = scmp.eq.s32.totalorder %s11, 0
      %p71 = por %p69, %p70
      %p72 = scmp.ne.s32.totalorder %s61, %s64
      %p73 = scmp.eq.s32.totalorder %s16, 1
      %p74 = por %p72, %p73
      %p75 = scmp.ne.s32.totalorder %s64, %s65
      %p76 = scmp.eq.s32.totalorder %s16, 0
      %p77 = por %p75, %p76
      %p78 = scmp.ne.s32.totalorder %s64, %s65
      %p79 = scmp.eq.s32.totalorder %s17, 1
      %p80 = por %p78, %p79
      %p82 = scmp.ne.s32.totalorder %s65, %s81
      %p83 = scmp.eq.s32.totalorder %s17, 0
      %p84 = por %p82, %p83
      %s85 = ssub.s32 %s18, %s30
      %s86 = ssub.s32 %s19, %s26
      %s87 = sor.u32 %s85, %s86
      %p88 = scmp.eq.s32.totalorder %s87, 0
      %s90 = sadd.s32 %s89, 1
      %s91 = scalar_select %p88, %s89, %s90
      %p94 = pneg %p88
      %p95 = scmp.eq.s32.totalorder %s11, 1
      %p96 = por %p94, %p95
      %p97 = scmp.ne.s32.totalorder %s89, %s92
      %p98 = scmp.eq.s32.totalorder %s11, 0
      %p99 = por %p97, %p98
      %p100 = scmp.ne.s32.totalorder %s89, %s92
      %p101 = scmp.eq.s32.totalorder %s16, 1
      %p102 = por %p100, %p101
      %p103 = scmp.ne.s32.totalorder %s92, %s93
      %p104 = scmp.eq.s32.totalorder %s16, 0
      %p105 = por %p103, %p104
      %p106 = scmp.ne.s32.totalorder %s92, %s93
      %p107 = scmp.eq.s32.totalorder %s17, 1
      %p108 = por %p106, %p107
      %p110 = scmp.ne.s32.totalorder %s93, %s109
      %p111 = scmp.eq.s32.totalorder %s17, 0
      %p112 = por %p110, %p111
      %p113 = scmp.le.s32.totalorder 1, %s11
      %p114 = scmp.lt.s32.totalorder %s11, 3
      %p115 = pnand %p113, %p114
      %p116 = pneg %p115
      // Predicated region
      $region9: #{tpu_custom_call.1} parent=5 // pred_check
        _
      $region10: #{tpu_custom_call.1} parent=5 // pred_check_branch
        %118 = sbr.rel (%p115) target = $region12
      $region11: #{tpu_custom_call.1} parent=5 // pred_region
        %s119 = ssub.s32 %s11, 1
      $region12: #{tpu_custom_call.1} parent=5 // pred_fallthru
        _
      %p120 = scmp.lt.s32.totalorder %s11, 2
      // Predicated region
      $region13: #{tpu_custom_call.1} parent=5 // pred_check
        %p121 = pneg %p120
      $region14: #{tpu_custom_call.1} parent=5 // pred_check_branch
        %123 = sbr.rel (%p121) target = $region16
      $region15: #{tpu_custom_call.1} parent=5 // pred_region
        // Predicated region
        $region17: #{tpu_custom_call.1} parent=15 // pred_check
          %p124 = pneg %p43
        $region18: #{tpu_custom_call.1} parent=15 // pred_check_branch
          %126 = sbr.rel (%p124) target = $region20
        $region19: #{tpu_custom_call.1} parent=15 // pred_region
          %p127 = scmp.lt.s32.totalorder %s18, 1
          %s128 = scalar_select %p127, %s18, 1
          %s129 = smul.addr %s128, 8
          %s130 = smul.addr %s129, 8
          %s131 = scalar_lea.vmem %s0, %s130
        $region20: #{tpu_custom_call.1} parent=15 // pred_fallthru
          _
        // Predicated region
        $region21: #{tpu_custom_call.1} parent=15 // pred_check
          %p132 = pneg %p71
        $region22: #{tpu_custom_call.1} parent=15 // pred_check_branch
          %134 = sbr.rel (%p132) target = $region24
        $region23: #{tpu_custom_call.1} parent=15 // pred_region
          %s135 = smul.u32 2, %s19
          %p136 = scmp.lt.s32.totalorder %s18, 1
          %s137 = scalar_select %p136, %s18, 1
          %p138 = scmp.lt.s32.totalorder %s135, 1
          %s139 = scalar_select %p138, %s135, 1
          %s140 = smul.addr %s137, 2
          %s141 = sadd.s32 %s139, %s140
          %s142 = smul.addr %s141, 2
          %s143 = scalar_lea.vmem %s1, %s142
          %s144 = smul.u32 2, %s19
        $region24: #{tpu_custom_call.1} parent=15 // pred_fallthru
          _
      $region16: #{tpu_custom_call.1} parent=5 // pred_fallthru
        _
      %p145 = scmp.le.s32.totalorder 1, %s11
      %p146 = scmp.lt.s32.totalorder %s11, 3
      %p147 = pnand %p145, %p146
      %p148 = pneg %p147
      // Predicated region
      $region25: #{tpu_custom_call.1} parent=5 // pred_check
        _
      $region26: #{tpu_custom_call.1} parent=5 // pred_check_branch
        %150 = sbr.rel (%p147) target = $region28
      $region27: #{tpu_custom_call.1} parent=5 // pred_region
        %s151 = ssub.s32 %s11, 1
        %p152 = scmp.lt.s32.totalorder %s20, 1
        %s153 = scalar_select %p152, %s20, 1
        %s154 = smul.addr %s153, 8
        %s155 = smul.addr %s154, 8
        %s156 = scalar_lea.vmem %s0, %s155
        %p157 = pneg %p49
        %p158 = pneg %p46
        %s159 = smul.u32 2, %s21
        %p160 = scmp.lt.s32.totalorder %s20, 1
        %s161 = scalar_select %p160, %s20, 1
        %p162 = scmp.lt.s32.totalorder %s159, 1
        %s163 = scalar_select %p162, %s159, 1
        %s164 = smul.addr %s161, 2
        %s165 = sadd.s32 %s163, %s164
        %s166 = smul.addr %s165, 2
        %s167 = scalar_lea.vmem %s1, %s166
        %p168 = pneg %p77
        %p169 = pneg %p74
        %p170 = pneg %p105
        %p171 = pneg %p102
        %s172 = sand.u32 %s92, 1
        %s173 = scalar_lea.sflag [#allocation3], %s172
        %s174 = sand.u32 %s92, 1
        %s175 = smul.addr %s174, 8
        %s176 = scalar_lea.vmem [#allocation2], %s175
        %p177 = scmp.lt.s32.totalorder %s20, 1
        %s178 = scalar_select %p177, %s20, 1
        %s179 = smul.addr %s178, 8
        %s180 = smul.addr %s179, 8
        %s181 = scalar_lea.vmem %s0, %s180
        %s182 = smul.u32 2, %s21
        %p183 = scmp.lt.s32.totalorder %s20, 1
        %s184 = scalar_select %p183, %s20, 1
        %p185 = scmp.lt.s32.totalorder %s182, 1
        %s186 = scalar_select %p185, %s182, 1
        %s187 = smul.addr %s184, 2
        %s188 = sadd.s32 %s186, %s187
        %s189 = smul.addr %s188, 2
        %s190 = scalar_lea.vmem %s1, %s189
        %s191 = smul.u32 2, %s21
        %s192 = smul.u32 2, %s21
        %v193 = vld [vmem:[%s181] sm:$0xff]
        %v194 = vld [vmem:[%s181 + $0x8] sm:$0xff]
        %v195 = vld [vmem:[%s181 + $0x10] sm:$0xff]
        %v196 = vld [vmem:[%s181 + $0x18] sm:$0xff]
        %v197 = vld [vmem:[%s181 + $0x20] sm:$0xff]
        %v198 = vld [vmem:[%s181 + $0x28] sm:$0xff]
        %v199 = vld [vmem:[%s181 + $0x30] sm:$0xff]
        %v200 = vld [vmem:[%s181 + $0x38] sm:$0xff]
        %v201 = vld [vmem:[%s190] sm:$0xf]
        %v202 = vadd.f32 %v201, 1.0
        %v203 = vmul.f32 %v202, 16.0
        %v204 = vsub.f32 %v203, 1.0
        %v205 = vmul.f32 %v204, 0.5
        %v206 = vmax.f32 %v205, -2.0
        %v207 = vmin.f32 %v206, 17.0
        %v208 = vfloor.f32 %v207
        %v209 = vcvt.f32.s32.to.zero.pseudo %v208
        %v210 = vadd.s32 %v209, 1
        %v211 = vsub.f32 %v207, %v208
        %v212 = vsub.f32 1.0, %v211
        %vm213 = vcmp.ge.s32.totalorder %v209, 0
        %vm214 = vcmp.le.s32.totalorder %v209, 15
        %vm215 = vmand %vm213, %vm214
        %v216 = vsel %vm215, 1, 0
        %v217 = vcvt.s32.f32 %v216
        %v218 = vmul.f32 %v212, %v217
        %vm219 = vcmp.ge.s32.totalorder %v210, 0
        %vm220 = vcmp.le.s32.totalorder %v210, 15
        %vm221 = vmand %vm219, %vm220
        %v222 = vsel %vm221, 1, 0
        %v223 = vcvt.s32.f32 %v222
        %v224 = vmul.f32 %v211, %v223
        %v225 = vlaneseq
        %v226 = vshrl.u32 %v225, 7
        %v227 = vadd.s32 %v226, 8
        %v228 = vperm.slane %v209, 0
        %v229 = vperm.slane %v209, 2
        %v230 = vperm.slane %v228, 0
        %v231 = vperm.slane %v229, 0
        %vm232 = vcmp.eq.s32.totalorder %v226, %v230
        %vm233 = vcmp.eq.s32.totalorder %v226, %v231
        %vm234 = vcmp.eq.s32.totalorder %v227, %v230
        %vm235 = vcmp.eq.s32.totalorder %v227, %v231
        %v237 = vperm.slane %v218, 0
        %v238 = vperm.slane %v218, 2
        %v241 = vperm.slane %v237, 0
        %v242 = vperm.slane %v238, 0
        %v243 = vsel %vm232, %v241, 0.0
        %v244 = vsel %vm233, %v242, 0.0
        %v245 = vsel %vm234, %v241, 0.0
        %v246 = vsel %vm235, %v242, 0.0
        %v247 = vperm.slane %v210, 0
        %v248 = vperm.slane %v210, 2
        %v249 = vperm.slane %v247, 0
        %v250 = vperm.slane %v248, 0
        %vm251 = vcmp.eq.s32.totalorder %v226, %v249
        %vm252 = vcmp.eq.s32.totalorder %v226, %v250
        %vm253 = vcmp.eq.s32.totalorder %v227, %v249
        %vm254 = vcmp.eq.s32.totalorder %v227, %v250
        %v256 = vperm.slane %v224, 0
        %v257 = vperm.slane %v224, 2
        %v260 = vperm.slane %v256, 0
        %v261 = vperm.slane %v257, 0
        %v262 = vsel %vm251, %v260, 0.0
        %v263 = vsel %vm252, %v261, 0.0
        %v264 = vsel %vm253, %v260, 0.0
        %v265 = vsel %vm254, %v261, 0.0
        %v266 = vadd.f32 %v243, %v262
        %v267 = vadd.f32 %v244, %v263
        %v268 = vadd.f32 %v245, %v264
        %v269 = vadd.f32 %v246, %v265
        %v270 = vperm.slane %v209, 1
        %v271 = vperm.slane %v209, 3
        %v272 = vperm.slane %v270, 1
        %v273 = vperm.slane %v271, 1
        %vm274 = vcmp.eq.s32.totalorder %v226, %v272
        %vm275 = vcmp.eq.s32.totalorder %v226, %v273
        %vm276 = vcmp.eq.s32.totalorder %v227, %v272
        %vm277 = vcmp.eq.s32.totalorder %v227, %v273
        %v278 = vperm.slane %v218, 1
        %v279 = vperm.slane %v218, 3
        %v282 = vperm.slane %v278, 1
        %v283 = vperm.slane %v279, 1
        %v284 = vsel %vm274, %v282, 0.0
        %v285 = vsel %vm275, %v283, 0.0
        %v286 = vsel %vm276, %v282, 0.0
        %v287 = vsel %vm277, %v283, 0.0
        %v288 = vperm.slane %v210, 1
        %v289 = vperm.slane %v210, 3
        %v290 = vperm.slane %v288, 1
        %v291 = vperm.slane %v289, 1
        %vm292 = vcmp.eq.s32.totalorder %v226, %v290
        %vm293 = vcmp.eq.s32.totalorder %v226, %v291
        %vm294 = vcmp.eq.s32.totalorder %v227, %v290
        %vm295 = vcmp.eq.s32.totalorder %v227, %v291
        %v296 = vperm.slane %v224, 1
        %v297 = vperm.slane %v224, 3
        %v300 = vperm.slane %v296, 1
        %v301 = vperm.slane %v297, 1
        %v302 = vsel %vm292, %v300, 0.0
        %v303 = vsel %vm293, %v301, 0.0
        %v304 = vsel %vm294, %v300, 0.0
        %v305 = vsel %vm295, %v301, 0.0
        %v306 = vadd.f32 %v284, %v302
        %v307 = vadd.f32 %v285, %v303
        %v308 = vadd.f32 %v286, %v304
        %v309 = vadd.f32 %v287, %v305
        %vm310 = vcmask 130048
        %v312 = vsel %vm310, %v193, 0
        %v315 = vsel %vm310, %v194, 0
        %v318 = vsel %vm310, %v195, 0
        %v321 = vsel %vm310, %v196, 0
        %v324 = vsel %vm310, %v197, 0
        %v327 = vsel %vm310, %v198, 0
        %v330 = vsel %vm310, %v199, 0
        %v333 = vsel %vm310, %v200, 0
        %335 = vmatpush.msra.mxu0 0.0
        %336 = vmatpush.msra.mxu0 0.0
        %337 = vmatpush.msra.mxu0 0.0
        %338 = vmatpush.msra.mxu0 0.0
        %339 = vmatpush.msra.mxu0 0.0
        %340 = vmatpush.msra.mxu0 0.0
        %341 = vmatpush.msra.mxu0 0.0
        %342 = vmatpush.msra.mxu0 0.0
        %343 = vmatpush.msra.mxu0 0.0
        %344 = vmatpush.msra.mxu0 0.0
        %345 = vmatpush.msra.mxu0 0.0
        %346 = vmatpush.msra.mxu0 0.0
        %347 = vmatpush.msra.mxu0 0.0
        %348 = vmatpush.msra.mxu0 0.0
        %349 = vmatpush.msra.mxu0 %v268
        %350 = vmatpush.msra.mxu0 %v266
        %351 = vmatmul.f32.gmra.mxu0 %v312
        %v352 = vpop.f32.mrf.mxu0
        %v353 = vadd.f32 0.0, %v352
        %354 = vmatmul.f32.gmra.mxu0 %v315
        %v355 = vpop.f32.mrf.mxu0
        %v356 = vadd.f32 0.0, %v355
        %357 = vmatmul.f32.gmra.mxu0 %v318
        %v358 = vpop.f32.mrf.mxu0
        %v359 = vadd.f32 0.0, %v358
        %360 = vmatmul.f32.gmra.mxu0 %v321
        %v361 = vpop.f32.mrf.mxu0
        %v362 = vadd.f32 0.0, %v361
        %363 = vmatmul.f32.gmra.mxu0 %v324
        %v364 = vpop.f32.mrf.mxu0
        %v365 = vadd.f32 0.0, %v364
        %366 = vmatmul.f32.gmra.mxu0 %v327
        %v367 = vpop.f32.mrf.mxu0
        %v368 = vadd.f32 0.0, %v367
        %369 = vmatmul.f32.gmra.mxu0 %v330
        %v370 = vpop.f32.mrf.mxu0
        %v371 = vadd.f32 0.0, %v370
        %372 = vmatmul.f32.gmra.mxu0 %v333
        %v373 = vpop.f32.mrf.mxu0
        %v374 = vadd.f32 0.0, %v373
        %375 = vdwg.mxu0
        %376 = vmatpush.msra.mxu0 0.0
        %377 = vmatpush.msra.mxu0 0.0
        %378 = vmatpush.msra.mxu0 0.0
        %379 = vmatpush.msra.mxu0 0.0
        %380 = vmatpush.msra.mxu0 0.0
        %381 = vmatpush.msra.mxu0 0.0
        %382 = vmatpush.msra.mxu0 0.0
        %383 = vmatpush.msra.mxu0 0.0
        %384 = vmatpush.msra.mxu0 0.0
        %385 = vmatpush.msra.mxu0 0.0
        %386 = vmatpush.msra.mxu0 0.0
        %387 = vmatpush.msra.mxu0 0.0
        %388 = vmatpush.msra.mxu0 0.0
        %389 = vmatpush.msra.mxu0 0.0
        %390 = vmatpush.msra.mxu0 %v269
        %391 = vmatpush.msra.mxu0 %v267
        %392 = vmatmul.f32.gmra.mxu0 %v312
        %v393 = vpop.f32.mrf.mxu0
        %v394 = vadd.f32 0.0, %v393
        %395 = vmatmul.f32.gmra.mxu0 %v315
        %v396 = vpop.f32.mrf.mxu0
        %v397 = vadd.f32 0.0, %v396
        %398 = vmatmul.f32.gmra.mxu0 %v318
        %v399 = vpop.f32.mrf.mxu0
        %v400 = vadd.f32 0.0, %v399
        %401 = vmatmul.f32.gmra.mxu0 %v321
        %v402 = vpop.f32.mrf.mxu0
        %v403 = vadd.f32 0.0, %v402
        %404 = vmatmul.f32.gmra.mxu0 %v324
        %v405 = vpop.f32.mrf.mxu0
        %v406 = vadd.f32 0.0, %v405
        %407 = vmatmul.f32.gmra.mxu0 %v327
        %v408 = vpop.f32.mrf.mxu0
        %v409 = vadd.f32 0.0, %v408
        %410 = vmatmul.f32.gmra.mxu0 %v330
        %v411 = vpop.f32.mrf.mxu0
        %v412 = vadd.f32 0.0, %v411
        %413 = vmatmul.f32.gmra.mxu0 %v333
        %v414 = vpop.f32.mrf.mxu0
        %v415 = vadd.f32 0.0, %v414
        %416 = vdwg.mxu0
        %v417 = vmul.f32 %v353, %v306
        %v418 = vmul.f32 %v394, %v307
        %v419 = vmul.f32 %v356, %v308
        %v420 = vmul.f32 %v397, %v309
        %v421 = vmul.f32 %v359, %v306
        %v422 = vmul.f32 %v400, %v307
        %v423 = vmul.f32 %v362, %v308
        %v424 = vmul.f32 %v403, %v309
        %v425 = vmul.f32 %v365, %v306
        %v426 = vmul.f32 %v406, %v307
        %v427 = vmul.f32 %v368, %v308
        %v428 = vmul.f32 %v409, %v309
        %v429 = vmul.f32 %v371, %v306
        %v430 = vmul.f32 %v412, %v307
        %v431 = vmul.f32 %v374, %v308
        %v432 = vmul.f32 %v415, %v309
        %v433 = vadd.f32 %v417, %v419
        %v434 = vrot.slane %v433, 4
        %v435 = vadd.f32 %v433, %v434
        %v436 = vrot.slane %v435, 2
        %v437 = vadd.f32 %v435, %v436
        %v438 = vrot.slane %v437, 1
        %v439 = vadd.f32 %v437, %v438
        %v440 = vadd.f32 %v418, %v420
        %v441 = vrot.slane %v440, 4
        %v442 = vadd.f32 %v440, %v441
        %v443 = vrot.slane %v442, 2
        %v444 = vadd.f32 %v442, %v443
        %v445 = vrot.slane %v444, 1
        %v446 = vadd.f32 %v444, %v445
        %v447 = vadd.f32 %v421, %v423
        %v448 = vrot.slane %v447, 4
        %v449 = vadd.f32 %v447, %v448
        %v450 = vrot.slane %v449, 2
        %v451 = vadd.f32 %v449, %v450
        %v452 = vrot.slane %v451, 1
        %v453 = vadd.f32 %v451, %v452
        %v454 = vadd.f32 %v422, %v424
        %v455 = vrot.slane %v454, 4
        %v456 = vadd.f32 %v454, %v455
        %v457 = vrot.slane %v456, 2
        %v458 = vadd.f32 %v456, %v457
        %v459 = vrot.slane %v458, 1
        %v460 = vadd.f32 %v458, %v459
        %v461 = vadd.f32 %v425, %v427
        %v462 = vrot.slane %v461, 4
        %v463 = vadd.f32 %v461, %v462
        %v464 = vrot.slane %v463, 2
        %v465 = vadd.f32 %v463, %v464
        %v466 = vrot.slane %v465, 1
        %v467 = vadd.f32 %v465, %v466
        %v468 = vadd.f32 %v426, %v428
        %v469 = vrot.slane %v468, 4
        %v470 = vadd.f32 %v468, %v469
        %v471 = vrot.slane %v470, 2
        %v472 = vadd.f32 %v470, %v471
        %v473 = vrot.slane %v472, 1
        %v474 = vadd.f32 %v472, %v473
        %v475 = vadd.f32 %v429, %v431
        %v476 = vrot.slane %v475, 4
        %v477 = vadd.f32 %v475, %v476
        %v478 = vrot.slane %v477, 2
        %v479 = vadd.f32 %v477, %v478
        %v480 = vrot.slane %v479, 1
        %v481 = vadd.f32 %v479, %v480
        %v482 = vadd.f32 %v430, %v432
        %v483 = vrot.slane %v482, 4
        %v484 = vadd.f32 %v482, %v483
        %v485 = vrot.slane %v484, 2
        %v486 = vadd.f32 %v484, %v485
        %v487 = vrot.slane %v486, 1
        %v488 = vadd.f32 %v486, %v487
        %v497 = vrot.slane %v446, 4
        %v498 = vrot.slane %v460, 4
        %v499 = vrot.slane %v474, 4
        %v500 = vrot.slane %v488, 4
        %vm501 = vcmask 1043456
        %v502 = vsel %vm501, %v439, %v497
        %v503 = vsel %vm501, %v453, %v498
        %v504 = vsel %vm501, %v467, %v499
        %v505 = vsel %vm501, %v481, %v500
        %v506 = vrot.slane %v503, 7
        %vm507 = vcmask 1041409
        %v508 = vsel %vm507, %v506, %v502
        %vm509 = vcmask 1045509
        %v510 = vsel %vm509, %v506, %v508
        %v511 = vrot.slane %v504, 6
        %vm512 = vcmask 1042434
        %v513 = vsel %vm512, %v511, %v510
        %vm514 = vcmask 1046534
        %v515 = vsel %vm514, %v511, %v513
        %v516 = vrot.slane %v505, 5
        %vm517 = vcmask 1043459
        %v518 = vsel %vm517, %v516, %v515
        %vm519 = vcmask 1047559
        %v520 = vsel %vm519, %v516, %v518
        %522 = vst [vmem:[%s176] sm:$0xff] %v520
        %s523 = sand.u32 %s92, 1
        %s524 = scalar_lea.sflag [#allocation3], %s523
        %s525 = sand.u32 %s92, 1
        %s526 = smul.addr %s525, 8
        %s527 = scalar_lea.vmem [#allocation2], %s526
        // Predicated region
        $region29: #{tpu_custom_call.1} parent=27 // pred_check
          %p528 = pneg %p102
        $region30: #{tpu_custom_call.1} parent=27 // pred_check_branch
          %530 = sbr.rel (%p528) target = $region32
        $region31: #{tpu_custom_call.1} parent=27 // pred_region
          %s531 = smul.u32 2, %s21
          %533 = vsyncadd %s524, 0
          %s534 = smul.addr %s20, 2
          %s535 = sadd.s32 %s531, %s534
          %s536 = smul.addr %s535, 4
          %s537 = scalar_lea.hbm %s2, %s536
          %s539 = sshll.u32 %s527, 4
          %s540 = int_to_ptr.vmem [resolvable:$true] %s539
          %s541 = sshll.u32 %s537, 4
          %s542 = int_to_ptr.hbm [resolvable:$true] %s541
          %544 = dma.vmem_to_hbm [thread:$0]  %s540, 128, %s542, %s524
        $region32: #{tpu_custom_call.1} parent=27 // pred_fallthru
          _
      $region28: #{tpu_custom_call.1} parent=5 // pred_fallthru
        _
      %p545 = scmp.le.s32.totalorder 2, %s11
      // Predicated region
      $region33: #{tpu_custom_call.1} parent=5 // pred_check
        %p546 = pneg %p545
      $region34: #{tpu_custom_call.1} parent=5 // pred_check_branch
        %548 = sbr.rel (%p546) target = $region36
      $region35: #{tpu_custom_call.1} parent=5 // pred_region
        %s549 = ssub.s32 %s11, 2
        // Predicated region
        $region37: #{tpu_custom_call.1} parent=35 // pred_check
          %p550 = pneg %p108
        $region38: #{tpu_custom_call.1} parent=35 // pred_check_branch
          %552 = sbr.rel (%p550) target = $region40
        $region39: #{tpu_custom_call.1} parent=35 // pred_region
          %s553 = sand.u32 %s93, 1
          %s554 = scalar_lea.sflag [#allocation3], %s553
          %s555 = sand.u32 %s93, 1
          %s556 = smul.addr %s555, 8
          %s557 = scalar_lea.vmem [#allocation2], %s556
          %559 = dma.done %s554, 128
        $region40: #{tpu_custom_call.1} parent=35 // pred_fallthru
          _
      $region36: #{tpu_custom_call.1} parent=5 // pred_fallthru
        _
    $region6: #{tpu_custom_call.1} parent=1 // loop_footer
      %s15 = sadd.s32 1, %s11
    $region7: #{tpu_custom_call.1} parent=1 // loop_footer_branch
      %10 = sbr.rel target = $region3
    $region8: #{tpu_custom_call.1} parent=1 // loop_exit
      _
    %560 = vsyncpa [#allocation3], 1
    %s561 = scalar_lea.sflag [#allocation3], 1
    %562 = vsyncpa %s561, 1

</llo_original>
